<compile_context>
chip_gen: v5e
topology: v5e:2x2
jax: 0.10.0
libtpu: 0.0.40
codegen_flags: <defaults>
</compile_context>

<pallas_src>
import functools

import jax
import jax.numpy as jnp
from jax.experimental import pallas as pl
from jax.experimental.pallas import tpu as pltpu

BN_EPS = 1e-5
LANE = 128
SUBLANE = 8


def _ceil_to(n, m):
    return ((n + m - 1) // m) * m


def _pad_to(a, shape):
    pads = [(0, t - s) for s, t in zip(a.shape, shape)]
    return jnp.pad(a, pads)


# ----------------------------------------------------------------------------
# Kernel 1: BatchNorm batch statistics -> folded scale/shift.
# Accumulates per-feature sum and sum-of-squares of h = x @ W1 + b1 over all
# batch tiles (single reduction pass), then finalizes:
#   scale = gamma * rsqrt(var + eps)
#   shift = beta + (b1 - mean) * scale        (Linear bias folded in)
# Output stats[0,:] = scale, stats[1,:] = shift (rows 2..7 unused padding).
# TODO(synk): BatchNorm1d running_mean/var buffer updates (training-time side
# effect) are not materialized; only the forward outputs are produced.
# ----------------------------------------------------------------------------
def bn_stats_kernel(x_ref, w1_ref, b1_ref, gamma_ref, beta_ref, stats_ref, *,
                    true_batch: int, block_batch: int):
    i = pl.program_id(0)
    nb = pl.num_programs(0)

    h = jnp.dot(x_ref[...], w1_ref[...], preferred_element_type=jnp.float32)
    h = h + b1_ref[...]

    # Mask rows that are batch padding so they do not pollute the statistics.
    row = i * block_batch + jax.lax.broadcasted_iota(jnp.int32, h.shape, 0)
    valid = (row < true_batch).astype(jnp.float32)
    hm = h * valid

    psum = jnp.sum(hm, axis=0, keepdims=True)          # (1, Hp)
    psumsq = jnp.sum(hm * hm, axis=0, keepdims=True)   # (1, Hp)

    @pl.when(i == 0)
    def _():
        stats_ref[...] = jnp.zeros_like(stats_ref)

    stats_ref[0:1, :] += psum
    stats_ref[1:2, :] += psumsq

    @pl.when(i == nb - 1)
    def _():
        inv_n = 1.0 / float(true_batch)
        mean = stats_ref[0:1, :] * inv_n
        var = jnp.maximum(stats_ref[1:2, :] * inv_n - mean * mean, 0.0)  # biased var
        scale = gamma_ref[...] * jax.lax.rsqrt(var + BN_EPS)
        shift = beta_ref[...] + (b1_ref[...] - mean) * scale
        stats_ref[0:1, :] = scale
        stats_ref[1:2, :] = shift


# ----------------------------------------------------------------------------
# Kernel 2: main forward, parallel over batch tiles.
# Folded BN (scale/shift), fused mu|logvar head, reparameterize, decoder.
# All matmul N dims and both outputs are lane-dense (multiples of 128).
# ----------------------------------------------------------------------------
def vae_main_kernel(x_ref, eps_ref, stats_ref, w1_ref, wh_ref, bh_ref,
                    w3_ref, b3_ref, w4_ref, b4_ref, xr_ref, mulv_ref, *,
                    latent_pad: int):
    scale = stats_ref[0:1, :]
    shift = stats_ref[1:2, :]

    # Encoder: Linear (bias folded into shift) + BatchNorm as scale/shift + ReLU.
    h = jnp.dot(x_ref[...], w1_ref[...], preferred_element_type=jnp.float32)
    h = jnp.maximum(h * scale + shift, 0.0)

    # Fused [mu | logvar] head: one matmul, lane-aligned halves of width latent_pad.
    y = jnp.dot(h, wh_ref[...], preferred_element_type=jnp.float32) + bh_ref[...]
    mulv_ref[...] = y                                     # lane-dense (TB, 2*latent_pad)

    mu = y[:, :latent_pad]
    logvar = y[:, latent_pad:]

    # Reparameterize (padded latent columns are exactly zero -> contribute nothing).
    z = mu + eps_ref[...] * jnp.exp(0.5 * logvar)

    # Decoder.
    z1 = jnp.dot(z, w3_ref[...], preferred_element_type=jnp.float32) + b3_ref[...]
    z1 = jnp.maximum(z1, 0.0)
    z2 = jnp.dot(z1, w4_ref[...], preferred_element_type=jnp.float32) + b4_ref[...]
    xr_ref[...] = jax.nn.sigmoid(z2)                      # lane-dense (TB, Fp)


# ----------------------------------------------------------------------------
# Wrapper
# ----------------------------------------------------------------------------
def pack_params(p, num_features, hidden, latent):
    """Zero-pad every feature dim to a multiple of 128 and fuse the mu/logvar head."""
    Fp = _ceil_to(num_features, LANE)
    Hp = _ceil_to(hidden, LANE)
    Lp = _ceil_to(latent, LANE)

    w_head = jnp.concatenate([_pad_to(p["wmu"], (hidden, Lp)),
                              _pad_to(p["wlv"], (hidden, Lp))], axis=1)   # (H, 2*Lp)
    b_head = jnp.concatenate([_pad_to(p["bmu"], (1, Lp)),
                              _pad_to(p["blv"], (1, Lp))], axis=1)        # (1, 2*Lp)
    return {
        "w1": _pad_to(p["w1"], (Fp, Hp)),
        "b1": _pad_to(p["b1"], (1, Hp)),
        "gamma": _pad_to(p["gamma"], (1, Hp)),
        "beta": _pad_to(p["beta"], (1, Hp)),
        "w_head": _pad_to(w_head, (Hp, 2 * Lp)),
        "b_head": b_head,
        "w3": _pad_to(p["w3"], (Lp, Hp)),
        "b3": _pad_to(p["b3"], (1, Hp)),
        "w4": _pad_to(p["w4"], (Hp, Fp)),
        "b4": _pad_to(p["b4"], (1, Fp)),
    }


def vae_forward(x, eps, packed, *, num_features, hidden, latent, block_batch=256):
    """Full VAE training-mode forward: stats pass + fused main pass."""
    B = x.shape[0]
    Fp, Hp = packed["w1"].shape
    Lp2 = packed["w_head"].shape[1]
    Lp = Lp2 // 2

    # Batch tiling (rows padded with zeros; stats kernel masks them out).
    TB = block_batch if B >= block_batch else _ceil_to(B, SUBLANE)
    Bp = _ceil_to(B, TB)
    nb = Bp // TB

    x_pad = _pad_to(x.astype(jnp.float32), (Bp, Fp))
    eps_pad = _pad_to(eps.astype(jnp.float32), (Bp, Lp))

    const = lambda i: (0, 0)
    tilei = lambda i: (i, 0)

    # Pass 1: batch statistics -> folded scale/shift (reduction over the batch grid axis).
    stats = pl.pallas_call(
        functools.partial(bn_stats_kernel, true_batch=B, block_batch=TB),
        out_shape=jax.ShapeDtypeStruct((SUBLANE, Hp), jnp.float32),
        grid=(nb,),
        in_specs=[
            pl.BlockSpec((TB, Fp), tilei),      # x tiles
            pl.BlockSpec((Fp, Hp), const),      # w1 (resident)
            pl.BlockSpec((1, Hp), const),       # b1
            pl.BlockSpec((1, Hp), const),       # gamma
            pl.BlockSpec((1, Hp), const),       # beta
        ],
        out_specs=pl.BlockSpec((SUBLANE, Hp), const),   # accumulator, resident
        compiler_params=pltpu.CompilerParams(dimension_semantics=("arbitrary",)),
    )(x_pad, packed["b1"] * 0 + packed["b1"], packed["b1"], packed["gamma"], packed["beta"]) \
        if False else pl.pallas_call(
        functools.partial(bn_stats_kernel, true_batch=B, block_batch=TB),
        out_shape=jax.ShapeDtypeStruct((SUBLANE, Hp), jnp.float32),
        grid=(nb,),
        in_specs=[
            pl.BlockSpec((TB, Fp), tilei),
            pl.BlockSpec((Fp, Hp), const),
            pl.BlockSpec((1, Hp), const),
            pl.BlockSpec((1, Hp), const),
            pl.BlockSpec((1, Hp), const),
        ],
        out_specs=pl.BlockSpec((SUBLANE, Hp), const),
        compiler_params=pltpu.CompilerParams(dimension_semantics=("arbitrary",)),
    )(x_pad, packed["w1"], packed["b1"], packed["gamma"], packed["beta"])

    # Pass 2: fused forward, independent (parallel) batch tiles.
    xr_pad, mulv = pl.pallas_call(
        functools.partial(vae_main_kernel, latent_pad=Lp),
        out_shape=(jax.ShapeDtypeStruct((Bp, Fp), jnp.float32),
                   jax.ShapeDtypeStruct((Bp, Lp2), jnp.float32)),
        grid=(nb,),
        in_specs=[
            pl.BlockSpec((TB, Fp), tilei),       # x tiles
            pl.BlockSpec((TB, Lp), tilei),       # eps tiles
            pl.BlockSpec((SUBLANE, Hp), const),  # folded BN scale/shift
            pl.BlockSpec((Fp, Hp), const),       # w1
            pl.BlockSpec((Hp, Lp2), const),      # fused [wmu|wlv]
            pl.BlockSpec((1, Lp2), const),       # fused [bmu|blv]
            pl.BlockSpec((Lp, Hp), const),       # w3
            pl.BlockSpec((1, Hp), const),        # b3
            pl.BlockSpec((Hp, Fp), const),       # w4
            pl.BlockSpec((1, Fp), const),        # b4
        ],
        out_specs=(pl.BlockSpec((TB, Fp), tilei),
                   pl.BlockSpec((TB, Lp2), tilei)),
        compiler_params=pltpu.CompilerParams(dimension_semantics=("parallel",)),
    )(x_pad, eps_pad, stats,
      packed["w1"], packed["w_head"], packed["b_head"],
      packed["w3"], packed["b3"], packed["w4"], packed["b4"])

    xr = xr_pad[:B, :num_features]
    mu = mulv[:B, :latent]
    logvar = mulv[:B, Lp:Lp + latent]
    return xr, mu, logvar


# ----------------------------------------------------------------------------
# Parameter init (shapes match the nn.Module) and pure-JAX reference.
# ----------------------------------------------------------------------------
def init_params(key, num_features, hidden_layer, encoded_dimensions):
    ks = jax.random.split(key, 10)

    def lin(kw, kb, fan_in, fan_out):
        bound = 1.0 / jnp.sqrt(fan_in)
        w = jax.random.uniform(kw, (fan_in, fan_out), jnp.float32, -bound, bound)
        b = jax.random.uniform(kb, (1, fan_out), jnp.float32, -bound, bound)
        return w, b

    w1, b1 = lin(ks[0], ks[1], num_features, hidden_layer)
    wmu, bmu = lin(ks[2], ks[3], hidden_layer, encoded_dimensions)
    wlv, blv = lin(ks[4], ks[5], hidden_layer, encoded_dimensions)
    w3, b3 = lin(ks[6], ks[7], encoded_dimensions, hidden_layer)
    w4, b4 = lin(ks[8], ks[9], hidden_layer, num_features)

    return {
        "w1": w1, "b1": b1,
        "gamma": jnp.ones((1, hidden_layer), jnp.float32),
        "beta": jnp.zeros((1, hidden_layer), jnp.float32),
        "wmu": wmu, "bmu": bmu,
        "wlv": wlv, "blv": blv,
        "w3": w3, "b3": b3,
        "w4": w4, "b4": b4,
    }


def vae_forward_ref(x, eps, p):
    h = x @ p["w1"] + p["b1"]
    mean = jnp.mean(h, axis=0, keepdims=True)
    var = jnp.mean((h - mean) ** 2, axis=0, keepdims=True)
    h = (h - mean) / jnp.sqrt(var + BN_EPS) * p["gamma"] + p["beta"]
    h = jnp.maximum(h, 0.0)
    mu = h @ p["wmu"] + p["bmu"]
    logvar = h @ p["wlv"] + p["blv"]
    z = mu + eps * jnp.exp(0.5 * logvar)
    z1 = jnp.maximum(z @ p["w3"] + p["b3"], 0.0)
    xr = jax.nn.sigmoid(z1 @ p["w4"] + p["b4"])
    return xr, mu, logvar


if __name__ == "__main__":
    # Shapes from the module: batch_size=512, hidden_layer=200, encoded_dimensions=11;
    # num_features=16 (emulator feature count, module-parametric).
    B, NUM_FEATURES, HIDDEN, LATENT = 512, 16, 200, 11

    key = jax.random.PRNGKey(0)
    k_x, k_eps, k_params = jax.random.split(key, 3)

    x = jax.random.uniform(k_x, (B, NUM_FEATURES), jnp.float32)   # VAE-style [0,1] input
    eps = jax.random.normal(k_eps, (B, LATENT), jnp.float32)      # reparameterization noise
    params = init_params(k_params, NUM_FEATURES, HIDDEN, LATENT)
    packed = pack_params(params, NUM_FEATURES, HIDDEN, LATENT)

    xr, mu, logvar = vae_forward(x, eps, packed,
                                 num_features=NUM_FEATURES, hidden=HIDDEN,
                                 latent=LATENT, block_batch=256)
    jax.block_until_ready((xr, mu, logvar))

    # Correctness vs pure-JAX reference (PyTorch training-mode semantics).
    xr_r, mu_r, lv_r = vae_forward_ref(x, eps, params)
    assert xr.shape == xr_r.shape and mu.shape == mu_r.shape and logvar.shape == lv_r.shape
    assert jnp.allclose(mu, mu_r, atol=2e-4, rtol=2e-4)
    assert jnp.allclose(logvar, lv_r, atol=2e-4, rtol=2e-4)
    assert jnp.allclose(xr, xr_r, atol=2e-4, rtol=2e-4)

    print("KERNEL_OK")
</pallas_src>

<mosaic_0001>
module attributes {stable_mosaic.version = 11 : i64} {
  func.func @bn_stats_kernel(%arg0: i32, %arg1: memref<256x128xf32, #tpu.memory_space<vmem>>, %arg2: memref<128x256xf32, #tpu.memory_space<vmem>>, %arg3: memref<1x256xf32, #tpu.memory_space<vmem>>, %arg4: memref<1x256xf32, #tpu.memory_space<vmem>>, %arg5: memref<1x256xf32, #tpu.memory_space<vmem>>, %arg6: memref<8x256xf32, #tpu.memory_space<vmem>>) attributes {dimension_semantics = [#tpu.dimension_semantics<arbitrary>], iteration_bounds = array<i64: 2>, scalar_prefetch = 0 : i64, scratch_operands = 0 : i64, tpu.core_type = #tpu.core_type<tc>, window_params = [{transform_indices = @transform_0, window_bounds = array<i64: 256, 128>}, {pipeline_mode = #tpu.pipeline_mode<synchronous>, transform_indices = @transform_1, window_bounds = array<i64: 128, 256>}, {pipeline_mode = #tpu.pipeline_mode<synchronous>, transform_indices = @transform_2, window_bounds = array<i64: 1, 256>}, {pipeline_mode = #tpu.pipeline_mode<synchronous>, transform_indices = @transform_3, window_bounds = array<i64: 1, 256>}, {pipeline_mode = #tpu.pipeline_mode<synchronous>, transform_indices = @transform_4, window_bounds = array<i64: 1, 256>}, {pipeline_mode = #tpu.pipeline_mode<synchronous>, transform_indices = @transform_5, window_bounds = array<i64: 8, 256>}]} {
    %c0 = arith.constant 0 : index
    %c0_0 = arith.constant 0 : index
    %0 = vector.load %arg1[%c0, %c0_0] : memref<256x128xf32, #tpu.memory_space<vmem>>, vector<256x128xf32>
    %c0_1 = arith.constant 0 : index
    %c0_2 = arith.constant 0 : index
    %1 = vector.load %arg2[%c0_1, %c0_2] : memref<128x256xf32, #tpu.memory_space<vmem>>, vector<128x256xf32>
    %cst = arith.constant dense<0.000000e+00> : vector<256x256xf32>
    %2 = tpu.matmul %0, %1, %cst {dimension_numbers = #tpu.dot_dimension_numbers<[1], [0], [0], [1], [0, 0, 1, 1], [], []>} : vector<256x128xf32>, vector<128x256xf32>, vector<256x256xf32> -> vector<256x256xf32>
    %c0_3 = arith.constant 0 : index
    %c0_4 = arith.constant 0 : index
    %3 = vector.load %arg3[%c0_3, %c0_4] : memref<1x256xf32, #tpu.memory_space<vmem>>, vector<1x256xf32>
    %4 = vector.broadcast %3 : vector<1x256xf32> to vector<256x256xf32>
    %5 = arith.addf %2, %4 : vector<256x256xf32>
    %c256_i32 = arith.constant 256 : i32
    %6 = arith.muli %arg0, %c256_i32 : i32
    %7 = tpu.iota {dimensions = array<i32: 0>} : vector<256x256xi32>
    %8 = vector.broadcast %6 : i32 to vector<256x256xi32>
    %9 = arith.addi %8, %7 : vector<256x256xi32>
    %c512_i32 = arith.constant 512 : i32
    %10 = vector.broadcast %c512_i32 : i32 to vector<256x256xi32>
    %11 = arith.cmpi slt, %9, %10 : vector<256x256xi32>
    %12 = arith.extui %11 : vector<256x256xi1> to vector<256x256xi32>
    %13 = arith.sitofp %12 : vector<256x256xi32> to vector<256x256xf32>
    %14 = arith.mulf %5, %13 : vector<256x256xf32>
    %cst_5 = arith.constant dense<0.000000e+00> : vector<256xf32>
    %15 = vector.multi_reduction <add>, %14, %cst_5 [0] : vector<256x256xf32> to vector<256xf32>
    %16 = vector.shape_cast %15 : vector<256xf32> to vector<1x256xf32>
    %17 = arith.mulf %14, %14 : vector<256x256xf32>
    %cst_6 = arith.constant dense<0.000000e+00> : vector<256xf32>
    %18 = vector.multi_reduction <add>, %17, %cst_6 [0] : vector<256x256xf32> to vector<256xf32>
    %19 = vector.shape_cast %18 : vector<256xf32> to vector<1x256xf32>
    %c0_i32 = arith.constant 0 : i32
    %20 = arith.cmpi eq, %arg0, %c0_i32 : i32
    %21 = arith.extui %20 : i1 to i32
    %c0_i32_7 = arith.constant 0 : i32
    %22 = arith.cmpi ne, %21, %c0_i32_7 : i32
    scf.if %22 {
      %cst_16 = arith.constant 0.000000e+00 : f32
      %32 = vector.broadcast %cst_16 : f32 to vector<8x256xf32>
      %c0_17 = arith.constant 0 : index
      %c0_18 = arith.constant 0 : index
      %33 = vector.load %arg6[%c0_17, %c0_18] : memref<8x256xf32, #tpu.memory_space<vmem>>, vector<8x256xf32>
      tpu.vector_store %arg6[%c0_17, %c0_18], %32 {strides = array<i32>} : memref<8x256xf32, #tpu.memory_space<vmem>>, vector<8x256xf32>,
    } else {
    }
    %c0_8 = arith.constant 0 : index
    %c0_9 = arith.constant 0 : index
    %23 = vector.load %arg6[%c0_8, %c0_9] : memref<8x256xf32, #tpu.memory_space<vmem>>, vector<1x256xf32>
    %24 = arith.addf %23, %16 : vector<1x256xf32>
    %c0_10 = arith.constant 0 : index
    %c0_11 = arith.constant 0 : index
    %25 = vector.load %arg6[%c0_10, %c0_11] : memref<8x256xf32, #tpu.memory_space<vmem>>, vector<1x256xf32>
    tpu.vector_store %arg6[%c0_10, %c0_11], %24 {strides = array<i32>} : memref<8x256xf32, #tpu.memory_space<vmem>>, vector<1x256xf32>,
    %c1 = arith.constant 1 : index
    %c0_12 = arith.constant 0 : index
    %26 = vector.load %arg6[%c1, %c0_12] : memref<8x256xf32, #tpu.memory_space<vmem>>, vector<1x256xf32>
    %27 = arith.addf %26, %19 : vector<1x256xf32>
    %c1_13 = arith.constant 1 : index
    %c0_14 = arith.constant 0 : index
    %28 = vector.load %arg6[%c1_13, %c0_14] : memref<8x256xf32, #tpu.memory_space<vmem>>, vector<1x256xf32>
    tpu.vector_store %arg6[%c1_13, %c0_14], %27 {strides = array<i32>} : memref<8x256xf32, #tpu.memory_space<vmem>>, vector<1x256xf32>,
    %c1_i32 = arith.constant 1 : i32
    %29 = arith.cmpi eq, %arg0, %c1_i32 : i32
    %30 = arith.extui %29 : i1 to i32
    %c0_i32_15 = arith.constant 0 : i32
    %31 = arith.cmpi ne, %30, %c0_i32_15 : i32
    scf.if %31 {
      %c0_16 = arith.constant 0 : index
      %c0_17 = arith.constant 0 : index
      %32 = vector.load %arg6[%c0_16, %c0_17] : memref<8x256xf32, #tpu.memory_space<vmem>>, vector<1x256xf32>
      %cst_18 = arith.constant 0.001953125 : f32
      %33 = vector.broadcast %cst_18 : f32 to vector<1x256xf32>
      %34 = arith.mulf %32, %33 : vector<1x256xf32>
      %c1_19 = arith.constant 1 : index
      %c0_20 = arith.constant 0 : index
      %35 = vector.load %arg6[%c1_19, %c0_20] : memref<8x256xf32, #tpu.memory_space<vmem>>, vector<1x256xf32>
      %cst_21 = arith.constant 0.001953125 : f32
      %36 = vector.broadcast %cst_21 : f32 to vector<1x256xf32>
      %37 = arith.mulf %35, %36 : vector<1x256xf32>
      %38 = arith.mulf %34, %34 : vector<1x256xf32>
      %39 = arith.subf %37, %38 : vector<1x256xf32>
      %cst_22 = arith.constant 0.000000e+00 : f32
      %40 = vector.broadcast %cst_22 : f32 to vector<1x256xf32>
      %41 = arith.maximumf %39, %40 : vector<1x256xf32>
      %c0_23 = arith.constant 0 : index
      %c0_24 = arith.constant 0 : index
      %42 = vector.load %arg4[%c0_23, %c0_24] : memref<1x256xf32, #tpu.memory_space<vmem>>, vector<1x256xf32>
      %cst_25 = arith.constant 9.99999974E-6 : f32
      %43 = vector.broadcast %cst_25 : f32 to vector<1x256xf32>
      %44 = arith.addf %41, %43 : vector<1x256xf32>
      %45 = math.rsqrt %44 : vector<1x256xf32>
      %46 = arith.mulf %42, %45 : vector<1x256xf32>
      %c0_26 = arith.constant 0 : index
      %c0_27 = arith.constant 0 : index
      %47 = vector.load %arg5[%c0_26, %c0_27] : memref<1x256xf32, #tpu.memory_space<vmem>>, vector<1x256xf32>
      %c0_28 = arith.constant 0 : index
      %c0_29 = arith.constant 0 : index
      %48 = vector.load %arg3[%c0_28, %c0_29] : memref<1x256xf32, #tpu.memory_space<vmem>>, vector<1x256xf32>
      %49 = arith.subf %48, %34 : vector<1x256xf32>
      %50 = arith.mulf %49, %46 : vector<1x256xf32>
      %51 = arith.addf %47, %50 : vector<1x256xf32>
      %c0_30 = arith.constant 0 : index
      %c0_31 = arith.constant 0 : index
      %52 = vector.load %arg6[%c0_30, %c0_31] : memref<8x256xf32, #tpu.memory_space<vmem>>, vector<1x256xf32>
      tpu.vector_store %arg6[%c0_30, %c0_31], %46 {strides = array<i32>} : memref<8x256xf32, #tpu.memory_space<vmem>>, vector<1x256xf32>,
      %c1_32 = arith.constant 1 : index
      %c0_33 = arith.constant 0 : index
      %53 = vector.load %arg6[%c1_32, %c0_33] : memref<8x256xf32, #tpu.memory_space<vmem>>, vector<1x256xf32>
      tpu.vector_store %arg6[%c1_32, %c0_33], %51 {strides = array<i32>} : memref<8x256xf32, #tpu.memory_space<vmem>>, vector<1x256xf32>,
    } else {
    }
    return
  }
  func.func @transform_0(%arg0: i32) -> (i32, i32) {
    %c0_i32 = arith.constant 0 : i32
    %c0_i32_0 = arith.constant 0 : i32
    return %arg0, %c0_i32 : i32, i32
  }
  func.func @transform_1(%arg0: i32) -> (i32, i32) {
    %c0_i32 = arith.constant 0 : i32
    %c0_i32_0 = arith.constant 0 : i32
    %c0_i32_1 = arith.constant 0 : i32
    return %c0_i32, %c0_i32_0 : i32, i32
  }
  func.func @transform_2(%arg0: i32) -> (i32, i32) {
    %c0_i32 = arith.constant 0 : i32
    %c0_i32_0 = arith.constant 0 : i32
    %c0_i32_1 = arith.constant 0 : i32
    return %c0_i32, %c0_i32_0 : i32, i32
  }
  func.func @transform_3(%arg0: i32) -> (i32, i32) {
    %c0_i32 = arith.constant 0 : i32
    %c0_i32_0 = arith.constant 0 : i32
    %c0_i32_1 = arith.constant 0 : i32
    return %c0_i32, %c0_i32_0 : i32, i32
  }
  func.func @transform_4(%arg0: i32) -> (i32, i32) {
    %c0_i32 = arith.constant 0 : i32
    %c0_i32_0 = arith.constant 0 : i32
    %c0_i32_1 = arith.constant 0 : i32
    return %c0_i32, %c0_i32_0 : i32, i32
  }
  func.func @transform_5(%arg0: i32) -> (i32, i32) {
    %c0_i32 = arith.constant 0 : i32
    %c0_i32_0 = arith.constant 0 : i32
    %c0_i32_1 = arith.constant 0 : i32
    return %c0_i32, %c0_i32_0 : i32, i32
  }
}

</mosaic_0001>

<llo_original>
// kernel: tpu_custom_call.1
$region0: #{tpu_custom_call.1}
  #allocation0 [shape = 'u32[]', space=smem, size = 0x4, offset = 0x4, fixed_abs, tag = 'smem constant byte address 0x4 - core index']
  #allocation1 [shape = 'u32[72,128]{1,0:T(1,128)}', space=vmem, size = 0x9000, scoped, tag = 'internal scratch']
  %s0 = inlined_call_operand.hbm [shape: f32[512,128], index: 0, kind: input, shape index: {}]
  %s1 = inlined_call_operand.hbm [shape: f32[128,256], index: 1, kind: input, shape index: {}]
  %s2 = inlined_call_operand.hbm [shape: f32[1,256], index: 2, kind: input, shape index: {}]
  %s3 = inlined_call_operand.vmem [shape: f32[1,256], index: 3, kind: input, shape index: {}]
  %s4 = inlined_call_operand.hbm [shape: f32[1,256], index: 4, kind: input, shape index: {}]
  %s5 = inlined_call_operand.hbm [shape: f32[8,256], index: 5, kind: output, shape index: {}]
  %s6 = sld [smem:[#allocation0]]
  $region77: #{tpu_custom_call.1} parent=0
    _
  %s8 = ssub.s32 1, %s6
  %s9 = scalar_select 0, %s8, %s6
  $region1: #{tpu_custom_call.1} parent=0
    #allocation2 [shape = 'u8[262144]{0}', space=vmem, size = 0x40000, scoped, tag = 'input window, operand 0']
    #allocation3 [shape = 's32[2]{0}', space=sflag, size = 0x8, scoped, tag = 'scoped memory for tpu_custom_call.1']
    #allocation4 [shape = 's32[2]{0}', space=sflag, size = 0x8, scoped, tag = 'scoped memory for tpu_custom_call.1']
    #allocation5 [shape = 'u8[131072]{0}', space=vmem, size = 0x20000, scoped, tag = 'input window, operand 1, single buffered']
    #allocation6 [shape = 's32[1]{0}', space=sflag, size = 0x4, scoped, tag = 'scoped memory for tpu_custom_call.1']
    #allocation7 [shape = 'u8[1024]{0}', space=vmem, size = 0x400, scoped, tag = 'input window, operand 2, single buffered']
    #allocation8 [shape = 'u8[1024]{0}', space=vmem, size = 0x400, scoped, tag = 'input window, operand 4, single buffered']
    #allocation9 [shape = 's32[1]{0}', space=sflag, size = 0x4, scoped, tag = 'scoped memory for tpu_custom_call.1']
    #allocation10 [shape = 'u8[8192]{0}', space=vmem, size = 0x2000, scoped, tag = 'output window, operand 0, single buffered']
    %10 = vsyncpa [#allocation3], 0
    %s11 = scalar_lea.sflag [#allocation3], 1
    %12 = vsyncpa %s11, 0
    %13 = vsyncpa [#allocation6], 0
    %14 = vsyncpa [#allocation9], 0
    %15 = vsyncpa [#allocation4], 0
    loop: start=0, step=1, limit=4
    $region2: #{tpu_custom_call.1} parent=1 // loop_pre_header
      _
    $region3: #{tpu_custom_call.1} parent=1 // loop_header
      %s17 = sphi 0, %s21
      %p18 = scmp.ge.s32.totalorder %s17, 4
      %s27 = sphi 0, %s29
      %s30 = sphi 0, %s27
      %s31 = sphi 0, %s30
      %s47 = sphi 0, %s31
      %s51 = sphi 0, %s51
      %s53 = sphi 0, %s51
      %s54 = sphi 0, %s53
      %s68 = sphi 0, %s54
      %s72 = sphi 0, %s72
      %s74 = sphi 0, %s72
      %s75 = sphi 0, %s74
      %s89 = sphi 0, %s75
      %s93 = sphi 0, %s93
      %s95 = sphi 0, %s93
      %s96 = sphi 0, %s95
      %s110 = sphi 0, %s96
      %s114 = sphi 0, %s114
      %s116 = sphi 0, %s114
      %s117 = sphi 0, %s116
      %s131 = sphi 0, %s117
      %s135 = sphi 0, %s135
      %s137 = sphi 0, %s135
      %s138 = sphi 0, %s137
      %s152 = sphi 0, %s138
    $region4: #{tpu_custom_call.1} parent=1 // loop_header_branch
      %20 = sbr.rel (%p18) target = $region8
    $region5: #{tpu_custom_call.1} parent=1 // loop_body
      %s22 = ssub.s32 %s17, 1
      %s23 = ssub.s32 %s17, 2
      %s24 = sadd.s32 %s17, 1
      %s25 = ssub.s32 %s17, %s24
      %p26 = scmp.eq.s32.totalorder %s25, 0
      %s28 = sadd.s32 %s27, 1
      %s29 = scalar_select %p26, %s27, %s28
      %p32 = pneg %p26
      %p33 = scmp.eq.s32.totalorder %s17, 1
      %p34 = por %p32, %p33
      %p35 = scmp.ne.s32.totalorder %s27, %s30
      %p36 = scmp.eq.s32.totalorder %s17, 0
      %p37 = por %p35, %p36
      %p38 = scmp.ne.s32.totalorder %s27, %s30
      %p39 = scmp.eq.s32.totalorder %s22, 1
      %p40 = por %p38, %p39
      %p41 = scmp.ne.s32.totalorder %s30, %s31
      %p42 = scmp.eq.s32.totalorder %s22, 0
      %p43 = por %p41, %p42
      %p44 = scmp.ne.s32.totalorder %s30, %s31
      %p45 = scmp.eq.s32.totalorder %s23, 1
      %p46 = por %p44, %p45
      %p48 = scmp.ne.s32.totalorder %s31, %s47
      %p49 = scmp.eq.s32.totalorder %s23, 0
      %p50 = por %p48, %p49
      %s52 = sadd.s32 %s51, 1
      %p55 = scmp.eq.s32.totalorder %s17, 1
      %p56 = scmp.ne.s32.totalorder %s51, %s53
      %p57 = scmp.eq.s32.totalorder %s17, 0
      %p58 = por %p56, %p57
      %p59 = scmp.ne.s32.totalorder %s51, %s53
      %p60 = scmp.eq.s32.totalorder %s22, 1
      %p61 = por %p59, %p60
      %p62 = scmp.ne.s32.totalorder %s53, %s54
      %p63 = scmp.eq.s32.totalorder %s22, 0
      %p64 = por %p62, %p63
      %p65 = scmp.ne.s32.totalorder %s53, %s54
      %p66 = scmp.eq.s32.totalorder %s23, 1
      %p67 = por %p65, %p66
      %p69 = scmp.ne.s32.totalorder %s54, %s68
      %p70 = scmp.eq.s32.totalorder %s23, 0
      %p71 = por %p69, %p70
      %s73 = sadd.s32 %s72, 1
      %p76 = scmp.eq.s32.totalorder %s17, 1
      %p77 = scmp.ne.s32.totalorder %s72, %s74
      %p78 = scmp.eq.s32.totalorder %s17, 0
      %p79 = por %p77, %p78
      %p80 = scmp.ne.s32.totalorder %s72, %s74
      %p81 = scmp.eq.s32.totalorder %s22, 1
      %p82 = por %p80, %p81
      %p83 = scmp.ne.s32.totalorder %s74, %s75
      %p84 = scmp.eq.s32.totalorder %s22, 0
      %p85 = por %p83, %p84
      %p86 = scmp.ne.s32.totalorder %s74, %s75
      %p87 = scmp.eq.s32.totalorder %s23, 1
      %p88 = por %p86, %p87
      %p90 = scmp.ne.s32.totalorder %s75, %s89
      %p91 = scmp.eq.s32.totalorder %s23, 0
      %p92 = por %p90, %p91
      %s94 = sadd.s32 %s93, 1
      %p97 = scmp.eq.s32.totalorder %s17, 1
      %p98 = scmp.ne.s32.totalorder %s93, %s95
      %p99 = scmp.eq.s32.totalorder %s17, 0
      %p100 = por %p98, %p99
      %p101 = scmp.ne.s32.totalorder %s93, %s95
      %p102 = scmp.eq.s32.totalorder %s22, 1
      %p103 = por %p101, %p102
      %p104 = scmp.ne.s32.totalorder %s95, %s96
      %p105 = scmp.eq.s32.totalorder %s22, 0
      %p106 = por %p104, %p105
      %p107 = scmp.ne.s32.totalorder %s95, %s96
      %p108 = scmp.eq.s32.totalorder %s23, 1
      %p109 = por %p107, %p108
      %p111 = scmp.ne.s32.totalorder %s96, %s110
      %p112 = scmp.eq.s32.totalorder %s23, 0
      %p113 = por %p111, %p112
      %s115 = sadd.s32 %s114, 1
      %p118 = scmp.eq.s32.totalorder %s17, 1
      %p119 = scmp.ne.s32.totalorder %s114, %s116
      %p120 = scmp.eq.s32.totalorder %s17, 0
      %p121 = por %p119, %p120
      %p122 = scmp.ne.s32.totalorder %s114, %s116
      %p123 = scmp.eq.s32.totalorder %s22, 1
      %p124 = por %p122, %p123
      %p125 = scmp.ne.s32.totalorder %s116, %s117
      %p126 = scmp.eq.s32.totalorder %s22, 0
      %p127 = por %p125, %p126
      %p128 = scmp.ne.s32.totalorder %s116, %s117
      %p129 = scmp.eq.s32.totalorder %s23, 1
      %p130 = por %p128, %p129
      %p132 = scmp.ne.s32.totalorder %s117, %s131
      %p133 = scmp.eq.s32.totalorder %s23, 0
      %p134 = por %p132, %p133
      %s136 = sadd.s32 %s135, 1
      %p139 = scmp.eq.s32.totalorder %s17, 1
      %p140 = scmp.ne.s32.totalorder %s135, %s137
      %p141 = scmp.eq.s32.totalorder %s17, 0
      %p142 = por %p140, %p141
      %p143 = scmp.ne.s32.totalorder %s135, %s137
      %p144 = scmp.eq.s32.totalorder %s22, 1
      %p145 = por %p143, %p144
      %p146 = scmp.ne.s32.totalorder %s137, %s138
      %p147 = scmp.eq.s32.totalorder %s22, 0
      %p148 = por %p146, %p147
      %p149 = scmp.ne.s32.totalorder %s137, %s138
      %p150 = scmp.eq.s32.totalorder %s23, 1
      %p151 = por %p149, %p150
      %p153 = scmp.ne.s32.totalorder %s138, %s152
      %p154 = scmp.eq.s32.totalorder %s23, 0
      %p155 = por %p153, %p154
      %p156 = scmp.le.s32.totalorder 1, %s17
      %p157 = scmp.lt.s32.totalorder %s17, 3
      %p158 = pnand %p156, %p157
      %p159 = pneg %p158
      // Predicated region
      $region9: #{tpu_custom_call.1} parent=5 // pred_check
        _
      $region10: #{tpu_custom_call.1} parent=5 // pred_check_branch
        %161 = sbr.rel (%p158) target = $region12
      $region11: #{tpu_custom_call.1} parent=5 // pred_region
        %s162 = ssub.s32 %s17, 1
        // Predicated region
        $region13: #{tpu_custom_call.1} parent=11 // pred_check
          %p163 = pneg %p64
        $region14: #{tpu_custom_call.1} parent=11 // pred_check_branch
          %165 = sbr.rel (%p163) target = $region16
        $region15: #{tpu_custom_call.1} parent=11 // pred_region
          %167 = vsyncadd [#allocation6], 0
          %s168 = sshll.u32 %s1, 4
          %s169 = int_to_ptr.hbm [resolvable:$true] %s168
          %s170 = sshll.u32 [#allocation5], 4
          %s171 = int_to_ptr.vmem [resolvable:$true] %s170
          %176 = dma.hbm_to_vmem [thread:$0]  %s169, 4096, %s171, [#allocation6], 256, 256, 16
        $region16: #{tpu_custom_call.1} parent=11 // pred_fallthru
          _
        // Predicated region
        $region17: #{tpu_custom_call.1} parent=11 // pred_check
          %p177 = pneg %p85
        $region18: #{tpu_custom_call.1} parent=11 // pred_check_branch
          %179 = sbr.rel (%p177) target = $region20
        $region19: #{tpu_custom_call.1} parent=11 // pred_region
          %181 = vsyncadd [#allocation6], 0
          %s183 = sshll.u32 %s2, 4
          %s184 = int_to_ptr.hbm [resolvable:$true] %s183
          %s185 = sshll.u32 [#allocation7], 4
          %s186 = int_to_ptr.vmem [resolvable:$true] %s185
          %188 = dma.hbm_to_vmem [thread:$0]  %s184, 32, %s186, [#allocation6]
        $region20: #{tpu_custom_call.1} parent=11 // pred_fallthru
          _
        // Predicated region
        $region21: #{tpu_custom_call.1} parent=11 // pred_check
          %p189 = pneg %p106
        $region22: #{tpu_custom_call.1} parent=11 // pred_check_branch
          %191 = sbr.rel (%p189) target = $region24
        $region23: #{tpu_custom_call.1} parent=11 // pred_region
          _
        $region24: #{tpu_custom_call.1} parent=11 // pred_fallthru
          _
        // Predicated region
        $region25: #{tpu_custom_call.1} parent=11 // pred_check
          %p192 = pneg %p127
        $region26: #{tpu_custom_call.1} parent=11 // pred_check_branch
          %194 = sbr.rel (%p192) target = $region28
        $region27: #{tpu_custom_call.1} parent=11 // pred_region
          %196 = vsyncadd [#allocation9], 0
          %s198 = sshll.u32 %s4, 4
          %s199 = int_to_ptr.hbm [resolvable:$true] %s198
          %s200 = sshll.u32 [#allocation8], 4
          %s201 = int_to_ptr.vmem [resolvable:$true] %s200
          %203 = dma.hbm_to_vmem [thread:$0]  %s199, 32, %s201, [#allocation9]
        $region28: #{tpu_custom_call.1} parent=11 // pred_fallthru
          _
      $region12: #{tpu_custom_call.1} parent=5 // pred_fallthru
        _
      %p204 = scmp.lt.s32.totalorder %s17, 2
      // Predicated region
      $region29: #{tpu_custom_call.1} parent=5 // pred_check
        %p205 = pneg %p204
      $region30: #{tpu_custom_call.1} parent=5 // pred_check_branch
        %207 = sbr.rel (%p205) target = $region32
      $region31: #{tpu_custom_call.1} parent=5 // pred_region
        // Predicated region
        $region33: #{tpu_custom_call.1} parent=31 // pred_check
          %p208 = pneg %p37
        $region34: #{tpu_custom_call.1} parent=31 // pred_check_branch
          %210 = sbr.rel (%p208) target = $region36
        $region35: #{tpu_custom_call.1} parent=31 // pred_region
          %s211 = sand.u32 %s27, 1
          %s212 = scalar_lea.sflag [#allocation3], %s211
          %s213 = sand.u32 %s27, 1
          %s214 = smul.addr %s213, 256
          %s215 = scalar_lea.vmem [#allocation2], %s214
          %s216 = smul.u32 32, %s17
          %218 = vsyncadd %s212, 0
          %s219 = smul.addr %s216, 8
          %s220 = scalar_lea.hbm %s0, %s219
          %s221 = sshll.u32 %s220, 4
          %s222 = int_to_ptr.hbm [resolvable:$true] %s221
          %s223 = sshll.u32 %s215, 4
          %s224 = int_to_ptr.vmem [resolvable:$true] %s223
          %229 = dma.hbm_to_vmem [thread:$0]  %s222, 4096, %s224, %s212, 128, 128, 8
        $region36: #{tpu_custom_call.1} parent=31 // pred_fallthru
          _
      $region32: #{tpu_custom_call.1} parent=5 // pred_fallthru
        _
      %p230 = scmp.le.s32.totalorder 1, %s17
      %p231 = scmp.lt.s32.totalorder %s17, 3
      %p232 = pnand %p230, %p231
      %p233 = pneg %p232
      // Predicated region
      $region37: #{tpu_custom_call.1} parent=5 // pred_check
        _
      $region38: #{tpu_custom_call.1} parent=5 // pred_check_branch
        %235 = sbr.rel (%p232) target = $region40
      $region39: #{tpu_custom_call.1} parent=5 // pred_region
        %s236 = ssub.s32 %s17, 1
        %s237 = sand.u32 %s30, 1
        %s238 = scalar_lea.sflag [#allocation3], %s237
        %s239 = sand.u32 %s30, 1
        %s240 = smul.addr %s239, 256
        %s241 = scalar_lea.vmem [#allocation2], %s240
        // Predicated region
        $region41: #{tpu_custom_call.1} parent=39 // pred_check
          %p242 = pneg %p43
        $region42: #{tpu_custom_call.1} parent=39 // pred_check_branch
          %244 = sbr.rel (%p242) target = $region44
        $region43: #{tpu_custom_call.1} parent=39 // pred_region
          %246 = dma.done %s238, 4096
        $region44: #{tpu_custom_call.1} parent=39 // pred_fallthru
          _
        // Predicated region
        $region45: #{tpu_custom_call.1} parent=39 // pred_check
          %p247 = pneg %p64
        $region46: #{tpu_custom_call.1} parent=39 // pred_check_branch
          %249 = sbr.rel (%p247) target = $region48
        $region47: #{tpu_custom_call.1} parent=39 // pred_region
          %251 = dma.done [#allocation6], 4096
        $region48: #{tpu_custom_call.1} parent=39 // pred_fallthru
          _
        // Predicated region
        $region49: #{tpu_custom_call.1} parent=39 // pred_check
          %p252 = pneg %p85
        $region50: #{tpu_custom_call.1} parent=39 // pred_check_branch
          %254 = sbr.rel (%p252) target = $region52
        $region51: #{tpu_custom_call.1} parent=39 // pred_region
          %256 = dma.done [#allocation6], 32
        $region52: #{tpu_custom_call.1} parent=39 // pred_fallthru
          _
        // Predicated region
        $region53: #{tpu_custom_call.1} parent=39 // pred_check
          %p257 = pneg %p127
        $region54: #{tpu_custom_call.1} parent=39 // pred_check_branch
          %259 = sbr.rel (%p257) target = $region56
        $region55: #{tpu_custom_call.1} parent=39 // pred_region
          %261 = dma.done [#allocation9], 32
        $region56: #{tpu_custom_call.1} parent=39 // pred_fallthru
          _
        %s262 = sand.u32 %s30, 1
        %s263 = scalar_lea.sflag [#allocation3], %s262
        %s264 = sand.u32 %s30, 1
        %s265 = smul.addr %s264, 256
        %s266 = scalar_lea.vmem [#allocation2], %s265
        %p267 = pneg %p43
        %p268 = pneg %p40
        %p269 = pneg %p64
        %p270 = pneg %p61
        %p271 = pneg %p85
        %p272 = pneg %p82
        %p273 = pneg %p106
        %p274 = pneg %p103
        %p275 = pneg %p127
        %p276 = pneg %p124
        %p277 = pneg %p148
        %p278 = pneg %p145
        %s279 = smul.u32 32, %s22
        %v280 = vld [vmem:[%s241] sm:$0xff]
        %v281 = vld [vmem:[%s241 + $0x8] sm:$0xff]
        %v282 = vld [vmem:[%s241 + $0x10] sm:$0xff]
        %v283 = vld [vmem:[%s241 + $0x18] sm:$0xff]
        %v284 = vld [vmem:[%s241 + $0x20] sm:$0xff]
        %v285 = vld [vmem:[%s241 + $0x28] sm:$0xff]
        %v286 = vld [vmem:[%s241 + $0x30] sm:$0xff]
        %v287 = vld [vmem:[%s241 + $0x38] sm:$0xff]
        %v288 = vld [vmem:[%s241 + $0x40] sm:$0xff]
        %v289 = vld [vmem:[%s241 + $0x48] sm:$0xff]
        %v290 = vld [vmem:[%s241 + $0x50] sm:$0xff]
        %v291 = vld [vmem:[%s241 + $0x58] sm:$0xff]
        %v292 = vld [vmem:[%s241 + $0x60] sm:$0xff]
        %v293 = vld [vmem:[%s241 + $0x68] sm:$0xff]
        %v294 = vld [vmem:[%s241 + $0x70] sm:$0xff]
        %v295 = vld [vmem:[%s241 + $0x78] sm:$0xff]
        %v296 = vld [vmem:[%s241 + $0x80] sm:$0xff]
        %v297 = vld [vmem:[%s241 + $0x88] sm:$0xff]
        %v298 = vld [vmem:[%s241 + $0x90] sm:$0xff]
        %v299 = vld [vmem:[%s241 + $0x98] sm:$0xff]
        %v300 = vld [vmem:[%s241 + $0xa0] sm:$0xff]
        %v301 = vld [vmem:[%s241 + $0xa8] sm:$0xff]
        %v302 = vld [vmem:[%s241 + $0xb0] sm:$0xff]
        %v303 = vld [vmem:[%s241 + $0xb8] sm:$0xff]
        %v304 = vld [vmem:[%s241 + $0xc0] sm:$0xff]
        %v305 = vld [vmem:[%s241 + $0xc8] sm:$0xff]
        %v306 = vld [vmem:[%s241 + $0xd0] sm:$0xff]
        %v307 = vld [vmem:[%s241 + $0xd8] sm:$0xff]
        %v308 = vld [vmem:[%s241 + $0xe0] sm:$0xff]
        %v309 = vld [vmem:[%s241 + $0xe8] sm:$0xff]
        %v310 = vld [vmem:[%s241 + $0xf0] sm:$0xff]
        %v311 = vld [vmem:[%s241 + $0xf8] sm:$0xff]
        %v312 = vld [vmem:[#allocation5] sm:$0xff]
        %v313 = vld [vmem:[#allocation5 + $0x8] sm:$0xff]
        %v314 = vld [vmem:[#allocation5 + $0x10] sm:$0xff]
        %v315 = vld [vmem:[#allocation5 + $0x18] sm:$0xff]
        %v316 = vld [vmem:[#allocation5 + $0x20] sm:$0xff]
        %v317 = vld [vmem:[#allocation5 + $0x28] sm:$0xff]
        %v318 = vld [vmem:[#allocation5 + $0x30] sm:$0xff]
        %v319 = vld [vmem:[#allocation5 + $0x38] sm:$0xff]
        %v320 = vld [vmem:[#allocation5 + $0x40] sm:$0xff]
        %v321 = vld [vmem:[#allocation5 + $0x48] sm:$0xff]
        %v322 = vld [vmem:[#allocation5 + $0x50] sm:$0xff]
        %v323 = vld [vmem:[#allocation5 + $0x58] sm:$0xff]
        %v324 = vld [vmem:[#allocation5 + $0x60] sm:$0xff]
        %v325 = vld [vmem:[#allocation5 + $0x68] sm:$0xff]
        %v326 = vld [vmem:[#allocation5 + $0x70] sm:$0xff]
        %v327 = vld [vmem:[#allocation5 + $0x78] sm:$0xff]
        %v328 = vld [vmem:[#allocation5 + $0x80] sm:$0xff]
        %v329 = vld [vmem:[#allocation5 + $0x88] sm:$0xff]
        %v330 = vld [vmem:[#allocation5 + $0x90] sm:$0xff]
        %v331 = vld [vmem:[#allocation5 + $0x98] sm:$0xff]
        %v332 = vld [vmem:[#allocation5 + $0xa0] sm:$0xff]
        %v333 = vld [vmem:[#allocation5 + $0xa8] sm:$0xff]
        %v334 = vld [vmem:[#allocation5 + $0xb0] sm:$0xff]
        %v335 = vld [vmem:[#allocation5 + $0xb8] sm:$0xff]
        %v336 = vld [vmem:[#allocation5 + $0xc0] sm:$0xff]
        %v337 = vld [vmem:[#allocation5 + $0xc8] sm:$0xff]
        %v338 = vld [vmem:[#allocation5 + $0xd0] sm:$0xff]
        %v339 = vld [vmem:[#allocation5 + $0xd8] sm:$0xff]
        %v340 = vld [vmem:[#allocation5 + $0xe0] sm:$0xff]
        %v341 = vld [vmem:[#allocation5 + $0xe8] sm:$0xff]
        %v342 = vld [vmem:[#allocation5 + $0xf0] sm:$0xff]
        %v343 = vld [vmem:[#allocation5 + $0xf8] sm:$0xff]
        %v344 = vld [vmem:[#allocation7] sm:$0x3]
        %v346 = vperm.slane %v344, 0
        %v347 = vperm.slane %v344, 1
        %350 = vmatpush.msra.mxu0 %v342
        %351 = vmatpush.msra.mxu0 %v340
        %352 = vmatpush.msra.mxu0 %v338
        %353 = vmatpush.msra.mxu0 %v336
        %354 = vmatpush.msra.mxu0 %v334
        %355 = vmatpush.msra.mxu0 %v332
        %356 = vmatpush.msra.mxu0 %v330
        %357 = vmatpush.msra.mxu0 %v328
        %358 = vmatpush.msra.mxu0 %v326
        %359 = vmatpush.msra.mxu0 %v324
        %360 = vmatpush.msra.mxu0 %v322
        %361 = vmatpush.msra.mxu0 %v320
        %362 = vmatpush.msra.mxu0 %v318
        %363 = vmatpush.msra.mxu0 %v316
        %364 = vmatpush.msra.mxu0 %v314
        %365 = vmatpush.msra.mxu0 %v312
        %366 = vmatmul.f32.gmra.mxu0 %v280
        %v367 = vpop.f32.mrf.mxu0
        %v368 = vadd.f32 %v346, %v367
        %369 = vmatmul.f32.gmra.mxu0 %v281
        %v370 = vpop.f32.mrf.mxu0
        %v371 = vadd.f32 %v346, %v370
        %372 = vmatmul.f32.gmra.mxu0 %v282
        %v373 = vpop.f32.mrf.mxu0
        %v374 = vadd.f32 %v346, %v373
        %375 = vmatmul.f32.gmra.mxu0 %v283
        %v376 = vpop.f32.mrf.mxu0
        %v377 = vadd.f32 %v346, %v376
        %378 = vmatmul.f32.gmra.mxu0 %v284
        %v379 = vpop.f32.mrf.mxu0
        %v380 = vadd.f32 %v346, %v379
        %381 = vmatmul.f32.gmra.mxu0 %v285
        %v382 = vpop.f32.mrf.mxu0
        %v383 = vadd.f32 %v346, %v382
        %384 = vmatmul.f32.gmra.mxu0 %v286
        %v385 = vpop.f32.mrf.mxu0
        %v386 = vadd.f32 %v346, %v385
        %387 = vmatmul.f32.gmra.mxu0 %v287
        %v388 = vpop.f32.mrf.mxu0
        %v389 = vadd.f32 %v346, %v388
        %390 = vmatmul.f32.gmra.mxu0 %v288
        %v391 = vpop.f32.mrf.mxu0
        %v392 = vadd.f32 %v346, %v391
        %393 = vmatmul.f32.gmra.mxu0 %v289
        %v394 = vpop.f32.mrf.mxu0
        %v395 = vadd.f32 %v346, %v394
        %396 = vmatmul.f32.gmra.mxu0 %v290
        %v397 = vpop.f32.mrf.mxu0
        %v398 = vadd.f32 %v346, %v397
        %399 = vmatmul.f32.gmra.mxu0 %v291
        %v400 = vpop.f32.mrf.mxu0
        %v401 = vadd.f32 %v346, %v400
        %402 = vmatmul.f32.gmra.mxu0 %v292
        %v403 = vpop.f32.mrf.mxu0
        %v404 = vadd.f32 %v346, %v403
        %405 = vmatmul.f32.gmra.mxu0 %v293
        %v406 = vpop.f32.mrf.mxu0
        %v407 = vadd.f32 %v346, %v406
        %408 = vmatmul.f32.gmra.mxu0 %v294
        %v409 = vpop.f32.mrf.mxu0
        %v410 = vadd.f32 %v346, %v409
        %411 = vmatmul.f32.gmra.mxu0 %v295
        %v412 = vpop.f32.mrf.mxu0
        %v413 = vadd.f32 %v346, %v412
        %414 = vmatmul.f32.gmra.mxu0 %v296
        %v415 = vpop.f32.mrf.mxu0
        %v416 = vadd.f32 %v346, %v415
        %417 = vmatmul.f32.gmra.mxu0 %v297
        %v418 = vpop.f32.mrf.mxu0
        %v419 = vadd.f32 %v346, %v418
        %420 = vmatmul.f32.gmra.mxu0 %v298
        %v421 = vpop.f32.mrf.mxu0
        %v422 = vadd.f32 %v346, %v421
        %423 = vmatmul.f32.gmra.mxu0 %v299
        %v424 = vpop.f32.mrf.mxu0
        %v425 = vadd.f32 %v346, %v424
        %426 = vmatmul.f32.gmra.mxu0 %v300
        %v427 = vpop.f32.mrf.mxu0
        %v428 = vadd.f32 %v346, %v427
        %429 = vmatmul.f32.gmra.mxu0 %v301
        %v430 = vpop.f32.mrf.mxu0
        %v431 = vadd.f32 %v346, %v430
        %432 = vmatmul.f32.gmra.mxu0 %v302
        %v433 = vpop.f32.mrf.mxu0
        %v434 = vadd.f32 %v346, %v433
        %435 = vmatmul.f32.gmra.mxu0 %v303
        %v436 = vpop.f32.mrf.mxu0
        %v437 = vadd.f32 %v346, %v436
        %438 = vmatmul.f32.gmra.mxu0 %v304
        %v439 = vpop.f32.mrf.mxu0
        %v440 = vadd.f32 %v346, %v439
        %441 = vmatmul.f32.gmra.mxu0 %v305
        %v442 = vpop.f32.mrf.mxu0
        %v443 = vadd.f32 %v346, %v442
        %444 = vmatmul.f32.gmra.mxu0 %v306
        %v445 = vpop.f32.mrf.mxu0
        %v446 = vadd.f32 %v346, %v445
        %447 = vmatmul.f32.gmra.mxu0 %v307
        %v448 = vpop.f32.mrf.mxu0
        %v449 = vadd.f32 %v346, %v448
        %450 = vmatmul.f32.gmra.mxu0 %v308
        %v451 = vpop.f32.mrf.mxu0
        %v452 = vadd.f32 %v346, %v451
        %453 = vmatmul.f32.gmra.mxu0 %v309
        %v454 = vpop.f32.mrf.mxu0
        %v455 = vadd.f32 %v346, %v454
        %456 = vmatmul.f32.gmra.mxu0 %v310
        %v457 = vpop.f32.mrf.mxu0
        %v458 = vadd.f32 %v346, %v457
        %459 = vmatmul.f32.gmra.mxu0 %v311
        %v460 = vpop.f32.mrf.mxu0
        %v461 = vadd.f32 %v346, %v460
        %462 = vdwg.mxu0
        %463 = vmatpush.msra.mxu0 %v343
        %464 = vmatpush.msra.mxu0 %v341
        %465 = vmatpush.msra.mxu0 %v339
        %466 = vmatpush.msra.mxu0 %v337
        %467 = vmatpush.msra.mxu0 %v335
        %468 = vmatpush.msra.mxu0 %v333
        %469 = vmatpush.msra.mxu0 %v331
        %470 = vmatpush.msra.mxu0 %v329
        %471 = vmatpush.msra.mxu0 %v327
        %472 = vmatpush.msra.mxu0 %v325
        %473 = vmatpush.msra.mxu0 %v323
        %474 = vmatpush.msra.mxu0 %v321
        %475 = vmatpush.msra.mxu0 %v319
        %476 = vmatpush.msra.mxu0 %v317
        %477 = vmatpush.msra.mxu0 %v315
        %478 = vmatpush.msra.mxu0 %v313
        %479 = vmatmul.f32.gmra.mxu0 %v280
        %v480 = vpop.f32.mrf.mxu0
        %v481 = vadd.f32 %v347, %v480
        %482 = vmatmul.f32.gmra.mxu0 %v281
        %v483 = vpop.f32.mrf.mxu0
        %v484 = vadd.f32 %v347, %v483
        %485 = vmatmul.f32.gmra.mxu0 %v282
        %v486 = vpop.f32.mrf.mxu0
        %v487 = vadd.f32 %v347, %v486
        %488 = vmatmul.f32.gmra.mxu0 %v283
        %v489 = vpop.f32.mrf.mxu0
        %v490 = vadd.f32 %v347, %v489
        %491 = vmatmul.f32.gmra.mxu0 %v284
        %v492 = vpop.f32.mrf.mxu0
        %v493 = vadd.f32 %v347, %v492
        %494 = vmatmul.f32.gmra.mxu0 %v285
        %v495 = vpop.f32.mrf.mxu0
        %v496 = vadd.f32 %v347, %v495
        %497 = vmatmul.f32.gmra.mxu0 %v286
        %v498 = vpop.f32.mrf.mxu0
        %v499 = vadd.f32 %v347, %v498
        %500 = vmatmul.f32.gmra.mxu0 %v287
        %v501 = vpop.f32.mrf.mxu0
        %v502 = vadd.f32 %v347, %v501
        %503 = vmatmul.f32.gmra.mxu0 %v288
        %v504 = vpop.f32.mrf.mxu0
        %v505 = vadd.f32 %v347, %v504
        %506 = vmatmul.f32.gmra.mxu0 %v289
        %v507 = vpop.f32.mrf.mxu0
        %v508 = vadd.f32 %v347, %v507
        %509 = vmatmul.f32.gmra.mxu0 %v290
        %v510 = vpop.f32.mrf.mxu0
        %v511 = vadd.f32 %v347, %v510
        %512 = vmatmul.f32.gmra.mxu0 %v291
        %v513 = vpop.f32.mrf.mxu0
        %v514 = vadd.f32 %v347, %v513
        %515 = vmatmul.f32.gmra.mxu0 %v292
        %v516 = vpop.f32.mrf.mxu0
        %v517 = vadd.f32 %v347, %v516
        %518 = vmatmul.f32.gmra.mxu0 %v293
        %v519 = vpop.f32.mrf.mxu0
        %v520 = vadd.f32 %v347, %v519
        %521 = vmatmul.f32.gmra.mxu0 %v294
        %v522 = vpop.f32.mrf.mxu0
        %v523 = vadd.f32 %v347, %v522
        %524 = vmatmul.f32.gmra.mxu0 %v295
        %v525 = vpop.f32.mrf.mxu0
        %v526 = vadd.f32 %v347, %v525
        %527 = vmatmul.f32.gmra.mxu0 %v296
        %v528 = vpop.f32.mrf.mxu0
        %v529 = vadd.f32 %v347, %v528
        %530 = vmatmul.f32.gmra.mxu0 %v297
        %v531 = vpop.f32.mrf.mxu0
        %v532 = vadd.f32 %v347, %v531
        %533 = vmatmul.f32.gmra.mxu0 %v298
        %v534 = vpop.f32.mrf.mxu0
        %v535 = vadd.f32 %v347, %v534
        %536 = vmatmul.f32.gmra.mxu0 %v299
        %v537 = vpop.f32.mrf.mxu0
        %v538 = vadd.f32 %v347, %v537
        %539 = vmatmul.f32.gmra.mxu0 %v300
        %v540 = vpop.f32.mrf.mxu0
        %v541 = vadd.f32 %v347, %v540
        %542 = vmatmul.f32.gmra.mxu0 %v301
        %v543 = vpop.f32.mrf.mxu0
        %v544 = vadd.f32 %v347, %v543
        %545 = vmatmul.f32.gmra.mxu0 %v302
        %v546 = vpop.f32.mrf.mxu0
        %v547 = vadd.f32 %v347, %v546
        %548 = vmatmul.f32.gmra.mxu0 %v303
        %v549 = vpop.f32.mrf.mxu0
        %v550 = vadd.f32 %v347, %v549
        %551 = vmatmul.f32.gmra.mxu0 %v304
        %v552 = vpop.f32.mrf.mxu0
        %v553 = vadd.f32 %v347, %v552
        %554 = vmatmul.f32.gmra.mxu0 %v305
        %v555 = vpop.f32.mrf.mxu0
        %v556 = vadd.f32 %v347, %v555
        %557 = vmatmul.f32.gmra.mxu0 %v306
        %v558 = vpop.f32.mrf.mxu0
        %v559 = vadd.f32 %v347, %v558
        %560 = vmatmul.f32.gmra.mxu0 %v307
        %v561 = vpop.f32.mrf.mxu0
        %v562 = vadd.f32 %v347, %v561
        %563 = vmatmul.f32.gmra.mxu0 %v308
        %v564 = vpop.f32.mrf.mxu0
        %v565 = vadd.f32 %v347, %v564
        %566 = vmatmul.f32.gmra.mxu0 %v309
        %v567 = vpop.f32.mrf.mxu0
        %v568 = vadd.f32 %v347, %v567
        %569 = vmatmul.f32.gmra.mxu0 %v310
        %v570 = vpop.f32.mrf.mxu0
        %v571 = vadd.f32 %v347, %v570
        %572 = vmatmul.f32.gmra.mxu0 %v311
        %v573 = vpop.f32.mrf.mxu0
        %v574 = vadd.f32 %v347, %v573
        %575 = vdwg.mxu0
        %s576 = smul.u32 %s22, 256
        %v577 = vlaneseq
        %v578 = vshrl.u32 %v577, 7
        %v579 = vadd.s32 %v578, 8
        %v580 = vadd.s32 %v578, 16
        %v581 = vadd.s32 %v578, 24
        %v582 = vadd.s32 %v578, 32
        %v583 = vadd.s32 %v578, 40
        %v584 = vadd.s32 %v578, 48
        %v585 = vadd.s32 %v578, 56
        %v586 = vadd.s32 %v578, 64
        %v587 = vadd.s32 %v578, 72
        %v588 = vadd.s32 %v578, 80
        %v589 = vadd.s32 %v578, 88
        %v590 = vadd.s32 %v578, 96
        %v591 = vadd.s32 %v578, 104
        %v592 = vadd.s32 %v578, 112
        %v593 = vadd.s32 %v578, 120
        %v594 = vadd.s32 %v578, 128
        %v595 = vadd.s32 %v578, 136
        %v596 = vadd.s32 %v578, 144
        %v597 = vadd.s32 %v578, 152
        %v598 = vadd.s32 %v578, 160
        %v599 = vadd.s32 %v578, 168
        %v600 = vadd.s32 %v578, 176
        %v601 = vadd.s32 %v578, 184
        %v602 = vadd.s32 %v578, 192
        %v603 = vadd.s32 %v578, 200
        %v604 = vadd.s32 %v578, 208
        %v605 = vadd.s32 %v578, 216
        %v606 = vadd.s32 %v578, 224
        %v607 = vadd.s32 %v578, 232
        %v608 = vadd.s32 %v578, 240
        %v609 = vadd.s32 %v578, 248
        %v610 = vstv %s576
        %v611 = vadd.s32 %v610, %v578
        %v612 = vadd.s32 %v610, %v579
        %v613 = vadd.s32 %v610, %v580
        %v614 = vadd.s32 %v610, %v581
        %v615 = vadd.s32 %v610, %v582
        %v616 = vadd.s32 %v610, %v583
        %v617 = vadd.s32 %v610, %v584
        %v618 = vadd.s32 %v610, %v585
        %v619 = vadd.s32 %v610, %v586
        %v620 = vadd.s32 %v610, %v587
        %v621 = vadd.s32 %v610, %v588
        %v622 = vadd.s32 %v610, %v589
        %v623 = vadd.s32 %v610, %v590
        %v624 = vadd.s32 %v610, %v591
        %v625 = vadd.s32 %v610, %v592
        %v626 = vadd.s32 %v610, %v593
        %v627 = vadd.s32 %v610, %v594
        %v628 = vadd.s32 %v610, %v595
        %v629 = vadd.s32 %v610, %v596
        %v630 = vadd.s32 %v610, %v597
        %v631 = vadd.s32 %v610, %v598
        %v632 = vadd.s32 %v610, %v599
        %v633 = vadd.s32 %v610, %v600
        %v634 = vadd.s32 %v610, %v601
        %v635 = vadd.s32 %v610, %v602
        %v636 = vadd.s32 %v610, %v603
        %v637 = vadd.s32 %v610, %v604
        %v638 = vadd.s32 %v610, %v605
        %v639 = vadd.s32 %v610, %v606
        %v640 = vadd.s32 %v610, %v607
        %v641 = vadd.s32 %v610, %v608
        %v642 = vadd.s32 %v610, %v609
        %vm643 = vcmp.lt.s32.totalorder %v611, 512
        %vm644 = vcmp.lt.s32.totalorder %v612, 512
        %vm645 = vcmp.lt.s32.totalorder %v613, 512
        %vm646 = vcmp.lt.s32.totalorder %v614, 512
        %vm647 = vcmp.lt.s32.totalorder %v615, 512
        %vm648 = vcmp.lt.s32.totalorder %v616, 512
        %vm649 = vcmp.lt.s32.totalorder %v617, 512
        %vm650 = vcmp.lt.s32.totalorder %v618, 512
        %vm651 = vcmp.lt.s32.totalorder %v619, 512
        %vm652 = vcmp.lt.s32.totalorder %v620, 512
        %vm653 = vcmp.lt.s32.totalorder %v621, 512
        %vm654 = vcmp.lt.s32.totalorder %v622, 512
        %vm655 = vcmp.lt.s32.totalorder %v623, 512
        %vm656 = vcmp.lt.s32.totalorder %v624, 512
        %vm657 = vcmp.lt.s32.totalorder %v625, 512
        %vm658 = vcmp.lt.s32.totalorder %v626, 512
        %vm659 = vcmp.lt.s32.totalorder %v627, 512
        %vm660 = vcmp.lt.s32.totalorder %v628, 512
        %vm661 = vcmp.lt.s32.totalorder %v629, 512
        %vm662 = vcmp.lt.s32.totalorder %v630, 512
        %vm663 = vcmp.lt.s32.totalorder %v631, 512
        %vm664 = vcmp.lt.s32.totalorder %v632, 512
        %vm665 = vcmp.lt.s32.totalorder %v633, 512
        %vm666 = vcmp.lt.s32.totalorder %v634, 512
        %vm667 = vcmp.lt.s32.totalorder %v635, 512
        %vm668 = vcmp.lt.s32.totalorder %v636, 512
        %vm669 = vcmp.lt.s32.totalorder %v637, 512
        %vm670 = vcmp.lt.s32.totalorder %v638, 512
        %vm671 = vcmp.lt.s32.totalorder %v639, 512
        %vm672 = vcmp.lt.s32.totalorder %v640, 512
        %vm673 = vcmp.lt.s32.totalorder %v641, 512
        %vm674 = vcmp.lt.s32.totalorder %v642, 512
        %v675 = vsel %vm643, 1, 0
        %v676 = vsel %vm644, 1, 0
        %v677 = vsel %vm645, 1, 0
        %v678 = vsel %vm646, 1, 0
        %v679 = vsel %vm647, 1, 0
        %v680 = vsel %vm648, 1, 0
        %v681 = vsel %vm649, 1, 0
        %v682 = vsel %vm650, 1, 0
        %v683 = vsel %vm651, 1, 0
        %v684 = vsel %vm652, 1, 0
        %v685 = vsel %vm653, 1, 0
        %v686 = vsel %vm654, 1, 0
        %v687 = vsel %vm655, 1, 0
        %v688 = vsel %vm656, 1, 0
        %v689 = vsel %vm657, 1, 0
        %v690 = vsel %vm658, 1, 0
        %v691 = vsel %vm659, 1, 0
        %v692 = vsel %vm660, 1, 0
        %v693 = vsel %vm661, 1, 0
        %v694 = vsel %vm662, 1, 0
        %v695 = vsel %vm663, 1, 0
        %v696 = vsel %vm664, 1, 0
        %v697 = vsel %vm665, 1, 0
        %v698 = vsel %vm666, 1, 0
        %v699 = vsel %vm667, 1, 0
        %v700 = vsel %vm668, 1, 0
        %v701 = vsel %vm669, 1, 0
        %v702 = vsel %vm670, 1, 0
        %v703 = vsel %vm671, 1, 0
        %v704 = vsel %vm672, 1, 0
        %v705 = vsel %vm673, 1, 0
        %v706 = vsel %vm674, 1, 0
        %v707 = vcvt.s32.f32 %v675
        %v708 = vcvt.s32.f32 %v676
        %v709 = vcvt.s32.f32 %v677
        %v710 = vcvt.s32.f32 %v678
        %v711 = vcvt.s32.f32 %v679
        %v712 = vcvt.s32.f32 %v680
        %v713 = vcvt.s32.f32 %v681
        %v714 = vcvt.s32.f32 %v682
        %v715 = vcvt.s32.f32 %v683
        %v716 = vcvt.s32.f32 %v684
        %v717 = vcvt.s32.f32 %v685
        %v718 = vcvt.s32.f32 %v686
        %v719 = vcvt.s32.f32 %v687
        %v720 = vcvt.s32.f32 %v688
        %v721 = vcvt.s32.f32 %v689
        %v722 = vcvt.s32.f32 %v690
        %v723 = vcvt.s32.f32 %v691
        %v724 = vcvt.s32.f32 %v692
        %v725 = vcvt.s32.f32 %v693
        %v726 = vcvt.s32.f32 %v694
        %v727 = vcvt.s32.f32 %v695
        %v728 = vcvt.s32.f32 %v696
        %v729 = vcvt.s32.f32 %v697
        %v730 = vcvt.s32.f32 %v698
        %v731 = vcvt.s32.f32 %v699
        %v732 = vcvt.s32.f32 %v700
        %v733 = vcvt.s32.f32 %v701
        %v734 = vcvt.s32.f32 %v702
        %v735 = vcvt.s32.f32 %v703
        %v736 = vcvt.s32.f32 %v704
        %v737 = vcvt.s32.f32 %v705
        %v738 = vcvt.s32.f32 %v706
        %v739 = vmul.f32 %v368, %v707
        %v740 = vmul.f32 %v481, %v707
        %v741 = vmul.f32 %v371, %v708
        %v742 = vmul.f32 %v484, %v708
        %v743 = vmul.f32 %v374, %v709
        %v744 = vmul.f32 %v487, %v709
        %v745 = vmul.f32 %v377, %v710
        %v746 = vmul.f32 %v490, %v710
        %v747 = vmul.f32 %v380, %v711
        %v748 = vmul.f32 %v493, %v711
        %v749 = vmul.f32 %v383, %v712
        %v750 = vmul.f32 %v496, %v712
        %v751 = vmul.f32 %v386, %v713
        %v752 = vmul.f32 %v499, %v713
        %v753 = vmul.f32 %v389, %v714
        %v754 = vmul.f32 %v502, %v714
        %v755 = vmul.f32 %v392, %v715
        %v756 = vmul.f32 %v505, %v715
        %v757 = vmul.f32 %v395, %v716
        %v758 = vmul.f32 %v508, %v716
        %v759 = vmul.f32 %v398, %v717
        %v760 = vmul.f32 %v511, %v717
        %v761 = vmul.f32 %v401, %v718
        %v762 = vmul.f32 %v514, %v718
        %v763 = vmul.f32 %v404, %v719
        %v764 = vmul.f32 %v517, %v719
        %v765 = vmul.f32 %v407, %v720
        %v766 = vmul.f32 %v520, %v720
        %v767 = vmul.f32 %v410, %v721
        %v768 = vmul.f32 %v523, %v721
        %v769 = vmul.f32 %v413, %v722
        %v770 = vmul.f32 %v526, %v722
        %v771 = vmul.f32 %v416, %v723
        %v772 = vmul.f32 %v529, %v723
        %v773 = vmul.f32 %v419, %v724
        %v774 = vmul.f32 %v532, %v724
        %v775 = vmul.f32 %v422, %v725
        %v776 = vmul.f32 %v535, %v725
        %v777 = vmul.f32 %v425, %v726
        %v778 = vmul.f32 %v538, %v726
        %v779 = vmul.f32 %v428, %v727
        %v780 = vmul.f32 %v541, %v727
        %v781 = vmul.f32 %v431, %v728
        %v782 = vmul.f32 %v544, %v728
        %v783 = vmul.f32 %v434, %v729
        %v784 = vmul.f32 %v547, %v729
        %v785 = vmul.f32 %v437, %v730
        %v786 = vmul.f32 %v550, %v730
        %v787 = vmul.f32 %v440, %v731
        %v788 = vmul.f32 %v553, %v731
        %v789 = vmul.f32 %v443, %v732
        %v790 = vmul.f32 %v556, %v732
        %v791 = vmul.f32 %v446, %v733
        %v792 = vmul.f32 %v559, %v733
        %v793 = vmul.f32 %v449, %v734
        %v794 = vmul.f32 %v562, %v734
        %v795 = vmul.f32 %v452, %v735
        %v796 = vmul.f32 %v565, %v735
        %v797 = vmul.f32 %v455, %v736
        %v798 = vmul.f32 %v568, %v736
        %v799 = vmul.f32 %v458, %v737
        %v800 = vmul.f32 %v571, %v737
        %v801 = vmul.f32 %v461, %v738
        %v802 = vmul.f32 %v574, %v738
        %v803 = vadd.f32 %v739, %v741
        %v804 = vadd.f32 %v803, %v743
        %v805 = vadd.f32 %v804, %v745
        %v806 = vadd.f32 %v805, %v747
        %v807 = vadd.f32 %v806, %v749
        %v808 = vadd.f32 %v807, %v751
        %v809 = vadd.f32 %v808, %v753
        %v810 = vadd.f32 %v809, %v755
        %v811 = vadd.f32 %v810, %v757
        %v812 = vadd.f32 %v811, %v759
        %v813 = vadd.f32 %v812, %v761
        %v814 = vadd.f32 %v813, %v763
        %v815 = vadd.f32 %v814, %v765
        %v816 = vadd.f32 %v815, %v767
        %v817 = vadd.f32 %v816, %v769
        %v818 = vadd.f32 %v817, %v771
        %v819 = vadd.f32 %v818, %v773
        %v820 = vadd.f32 %v819, %v775
        %v821 = vadd.f32 %v820, %v777
        %v822 = vadd.f32 %v821, %v779
        %v823 = vadd.f32 %v822, %v781
        %v824 = vadd.f32 %v823, %v783
        %v825 = vadd.f32 %v824, %v785
        %v826 = vadd.f32 %v825, %v787
        %v827 = vadd.f32 %v826, %v789
        %v828 = vadd.f32 %v827, %v791
        %v829 = vadd.f32 %v828, %v793
        %v830 = vadd.f32 %v829, %v795
        %v831 = vadd.f32 %v830, %v797
        %v832 = vadd.f32 %v831, %v799
        %v833 = vadd.f32 %v832, %v801
        %v834 = vrot.slane %v833, 4
        %v835 = vadd.f32 %v833, %v834
        %v836 = vrot.slane %v835, 2
        %v837 = vadd.f32 %v835, %v836
        %v838 = vrot.slane %v837, 1
        %v839 = vadd.f32 %v837, %v838
        %v840 = vadd.f32 %v740, %v742
        %v841 = vadd.f32 %v840, %v744
        %v842 = vadd.f32 %v841, %v746
        %v843 = vadd.f32 %v842, %v748
        %v844 = vadd.f32 %v843, %v750
        %v845 = vadd.f32 %v844, %v752
        %v846 = vadd.f32 %v845, %v754
        %v847 = vadd.f32 %v846, %v756
        %v848 = vadd.f32 %v847, %v758
        %v849 = vadd.f32 %v848, %v760
        %v850 = vadd.f32 %v849, %v762
        %v851 = vadd.f32 %v850, %v764
        %v852 = vadd.f32 %v851, %v766
        %v853 = vadd.f32 %v852, %v768
        %v854 = vadd.f32 %v853, %v770
        %v855 = vadd.f32 %v854, %v772
        %v856 = vadd.f32 %v855, %v774
        %v857 = vadd.f32 %v856, %v776
        %v858 = vadd.f32 %v857, %v778
        %v859 = vadd.f32 %v858, %v780
        %v860 = vadd.f32 %v859, %v782
        %v861 = vadd.f32 %v860, %v784
        %v862 = vadd.f32 %v861, %v786
        %v863 = vadd.f32 %v862, %v788
        %v864 = vadd.f32 %v863, %v790
        %v865 = vadd.f32 %v864, %v792
        %v866 = vadd.f32 %v865, %v794
        %v867 = vadd.f32 %v866, %v796
        %v868 = vadd.f32 %v867, %v798
        %v869 = vadd.f32 %v868, %v800
        %v870 = vadd.f32 %v869, %v802
        %v871 = vrot.slane %v870, 4
        %v872 = vadd.f32 %v870, %v871
        %v873 = vrot.slane %v872, 2
        %v874 = vadd.f32 %v872, %v873
        %v875 = vrot.slane %v874, 1
        %v876 = vadd.f32 %v874, %v875
        %v877 = vmul.f32 %v739, %v739
        %v878 = vmul.f32 %v740, %v740
        %v879 = vmul.f32 %v741, %v741
        %v880 = vmul.f32 %v742, %v742
        %v881 = vmul.f32 %v743, %v743
        %v882 = vmul.f32 %v744, %v744
        %v883 = vmul.f32 %v745, %v745
        %v884 = vmul.f32 %v746, %v746
        %v885 = vmul.f32 %v747, %v747
        %v886 = vmul.f32 %v748, %v748
        %v887 = vmul.f32 %v749, %v749
        %v888 = vmul.f32 %v750, %v750
        %v889 = vmul.f32 %v751, %v751
        %v890 = vmul.f32 %v752, %v752
        %v891 = vmul.f32 %v753, %v753
        %v892 = vmul.f32 %v754, %v754
        %v893 = vmul.f32 %v755, %v755
        %v894 = vmul.f32 %v756, %v756
        %v895 = vmul.f32 %v757, %v757
        %v896 = vmul.f32 %v758, %v758
        %v897 = vmul.f32 %v759, %v759
        %v898 = vmul.f32 %v760, %v760
        %v899 = vmul.f32 %v761, %v761
        %v900 = vmul.f32 %v762, %v762
        %v901 = vmul.f32 %v763, %v763
        %v902 = vmul.f32 %v764, %v764
        %v903 = vmul.f32 %v765, %v765
        %v904 = vmul.f32 %v766, %v766
        %v905 = vmul.f32 %v767, %v767
        %v906 = vmul.f32 %v768, %v768
        %v907 = vmul.f32 %v769, %v769
        %v908 = vmul.f32 %v770, %v770
        %v909 = vmul.f32 %v771, %v771
        %v910 = vmul.f32 %v772, %v772
        %v911 = vmul.f32 %v773, %v773
        %v912 = vmul.f32 %v774, %v774
        %v913 = vmul.f32 %v775, %v775
        %v914 = vmul.f32 %v776, %v776
        %v915 = vmul.f32 %v777, %v777
        %v916 = vmul.f32 %v778, %v778
        %v917 = vmul.f32 %v779, %v779
        %v918 = vmul.f32 %v780, %v780
        %v919 = vmul.f32 %v781, %v781
        %v920 = vmul.f32 %v782, %v782
        %v921 = vmul.f32 %v783, %v783
        %v922 = vmul.f32 %v784, %v784
        %v923 = vmul.f32 %v785, %v785
        %v924 = vmul.f32 %v786, %v786
        %v925 = vmul.f32 %v787, %v787
        %v926 = vmul.f32 %v788, %v788
        %v927 = vmul.f32 %v789, %v789
        %v928 = vmul.f32 %v790, %v790
        %v929 = vmul.f32 %v791, %v791
        %v930 = vmul.f32 %v792, %v792
        %v931 = vmul.f32 %v793, %v793
        %v932 = vmul.f32 %v794, %v794
        %v933 = vmul.f32 %v795, %v795
        %v934 = vmul.f32 %v796, %v796
        %v935 = vmul.f32 %v797, %v797
        %v936 = vmul.f32 %v798, %v798
        %v937 = vmul.f32 %v799, %v799
        %v938 = vmul.f32 %v800, %v800
        %v939 = vmul.f32 %v801, %v801
        %v940 = vmul.f32 %v802, %v802
        %v941 = vadd.f32 %v877, %v879
        %v942 = vadd.f32 %v941, %v881
        %v943 = vadd.f32 %v942, %v883
        %v944 = vadd.f32 %v943, %v885
        %v945 = vadd.f32 %v944, %v887
        %v946 = vadd.f32 %v945, %v889
        %v947 = vadd.f32 %v946, %v891
        %v948 = vadd.f32 %v947, %v893
        %v949 = vadd.f32 %v948, %v895
        %v950 = vadd.f32 %v949, %v897
        %v951 = vadd.f32 %v950, %v899
        %v952 = vadd.f32 %v951, %v901
        %v953 = vadd.f32 %v952, %v903
        %v954 = vadd.f32 %v953, %v905
        %v955 = vadd.f32 %v954, %v907
        %v956 = vadd.f32 %v955, %v909
        %v957 = vadd.f32 %v956, %v911
        %v958 = vadd.f32 %v957, %v913
        %v959 = vadd.f32 %v958, %v915
        %v960 = vadd.f32 %v959, %v917
        %v961 = vadd.f32 %v960, %v919
        %v962 = vadd.f32 %v961, %v921
        %v963 = vadd.f32 %v962, %v923
        %v964 = vadd.f32 %v963, %v925
        %v965 = vadd.f32 %v964, %v927
        %v966 = vadd.f32 %v965, %v929
        %v967 = vadd.f32 %v966, %v931
        %v968 = vadd.f32 %v967, %v933
        %v969 = vadd.f32 %v968, %v935
        %v970 = vadd.f32 %v969, %v937
        %v971 = vadd.f32 %v970, %v939
        %v972 = vrot.slane %v971, 4
        %v973 = vadd.f32 %v971, %v972
        %v974 = vrot.slane %v973, 2
        %v975 = vadd.f32 %v973, %v974
        %v976 = vrot.slane %v975, 1
        %v977 = vadd.f32 %v975, %v976
        %v978 = vadd.f32 %v878, %v880
        %v979 = vadd.f32 %v978, %v882
        %v980 = vadd.f32 %v979, %v884
        %v981 = vadd.f32 %v980, %v886
        %v982 = vadd.f32 %v981, %v888
        %v983 = vadd.f32 %v982, %v890
        %v984 = vadd.f32 %v983, %v892
        %v985 = vadd.f32 %v984, %v894
        %v986 = vadd.f32 %v985, %v896
        %v987 = vadd.f32 %v986, %v898
        %v988 = vadd.f32 %v987, %v900
        %v989 = vadd.f32 %v988, %v902
        %v990 = vadd.f32 %v989, %v904
        %v991 = vadd.f32 %v990, %v906
        %v992 = vadd.f32 %v991, %v908
        %v993 = vadd.f32 %v992, %v910
        %v994 = vadd.f32 %v993, %v912
        %v995 = vadd.f32 %v994, %v914
        %v996 = vadd.f32 %v995, %v916
        %v997 = vadd.f32 %v996, %v918
        %v998 = vadd.f32 %v997, %v920
        %v999 = vadd.f32 %v998, %v922
        %v1000 = vadd.f32 %v999, %v924
        %v1001 = vadd.f32 %v1000, %v926
        %v1002 = vadd.f32 %v1001, %v928
        %v1003 = vadd.f32 %v1002, %v930
        %v1004 = vadd.f32 %v1003, %v932
        %v1005 = vadd.f32 %v1004, %v934
        %v1006 = vadd.f32 %v1005, %v936
        %v1007 = vadd.f32 %v1006, %v938
        %v1008 = vadd.f32 %v1007, %v940
        %v1009 = vrot.slane %v1008, 4
        %v1010 = vadd.f32 %v1008, %v1009
        %v1011 = vrot.slane %v1010, 2
        %v1012 = vadd.f32 %v1010, %v1011
        %v1013 = vrot.slane %v1012, 1
        %v1014 = vadd.f32 %v1012, %v1013
        %p1015 = scmp.eq.s32.totalorder %s22, 0
        // Predicated region
        $region57: #{tpu_custom_call.1} parent=39 // pred_check
          %p1016 = pneg %p1015
        $region58: #{tpu_custom_call.1} parent=39 // pred_check_branch
          %1018 = sbr.rel (%p1016) target = $region60
        $region59: #{tpu_custom_call.1} parent=39 // pred_region
          %1019 = vst [vmem:[#allocation10] sm:$0xff] 0.0
          %1020 = vst [vmem:[#allocation10 + $0x8] sm:$0xff] 0.0
        $region60: #{tpu_custom_call.1} parent=39 // pred_fallthru
          _
        %v1021 = vld [vmem:[#allocation10] ss:$8 sm:$0x3]
        %v1024 = vrot.slane %v876, 7
        %vm1025 = vcmask 1040384
        %v1026 = vsel %vm1025, %v839, %v1024
        %v1028 = vadd.f32 %v1021, %v1026
        %v1029 = vlaneseq
        %vm1030 = vcmp.ge.s32.totalorder %v1029, 0
        %vm1031 = vcmp.lt.s32.totalorder %v1029, 256
        %vm1032 = vmand %vm1030, %vm1031
        %1033 = vst.msk [vmem:[#allocation10] ss:$8 sm:$0x3] %vm1032, %v1028
        %1034 = vst.msk [vmem:[#allocation10] ss:$8 sm:$0x0] %vm1032, %v1028
        %s1035 = scalar_lea.vmem [#allocation10], 1
        %v1036 = vld [vmem:[%s1035] ss:$8 sm:$0x3]
        %v1039 = vrot.slane %v1014, 7
        %v1040 = vsel %vm1025, %v977, %v1039
        %v1042 = vadd.f32 %v1036, %v1040
        %1043 = vst.msk [vmem:[%s1035] ss:$8 sm:$0x3] %vm1032, %v1042
        %1044 = vst.msk [vmem:[%s1035] ss:$8 sm:$0x0] %vm1032, %v1042
        %p1045 = scmp.eq.s32.totalorder %s22, 1
        // Predicated region
        $region61: #{tpu_custom_call.1} parent=39 // pred_check
          %p1046 = pneg %p1045
        $region62: #{tpu_custom_call.1} parent=39 // pred_check_branch
          %1048 = sbr.rel (%p1046) target = $region64
        $region63: #{tpu_custom_call.1} parent=39 // pred_region
          %v1049 = vld [vmem:[#allocation10] ss:$8 sm:$0x3]
          %v1050 = vmul.f32 %v1049, 0.001953125
          %v1051 = vld [vmem:[%s1035] ss:$8 sm:$0x3]
          %v1052 = vmul.f32 %v1051, 0.001953125
          %v1053 = vmul.f32 %v1050, %v1050
          %v1054 = vsub.f32 %v1052, %v1053
          %v1055 = vmax.f32 %v1054, 0.0
          %v1056 = vld [vmem:[%s3] sm:$0x3]
          %v1057 = vadd.f32 %v1055, 1e-05
          %v1058 = vrsqrt.pop %v1057
          %v1059 = vmul.f32 %v1058, %v1057
          %v1060 = vmul.f32 %v1059, %v1058
          %v1061 = vmul.f32 0.5, %v1060
          %v1062 = vsub.f32 1.5, %v1061
          %v1063 = vmul.f32 %v1058, %v1062
          %vm1064 = vweird.f32 %v1057
          %vm1065 = vweird.f32 %v1058
          %vm1066 = vmor %vm1064, %vm1065
          %v1067 = vsel %vm1066, %v1058, %v1063
          %v1068 = vmul.f32 %v1056, %v1067
          %v1069 = vld [vmem:[#allocation8] sm:$0x3]
          %v1070 = vld [vmem:[#allocation7] sm:$0x3]
          %v1071 = vsub.f32 %v1070, %v1050
          %v1072 = vmul.f32 %v1071, %v1068
          %v1073 = vadd.f32 %v1069, %v1072
          %1074 = vst.msk [vmem:[#allocation10] ss:$8 sm:$0x3] %vm1032, %v1068
          %1075 = vst.msk [vmem:[#allocation10] ss:$8 sm:$0x0] %vm1032, %v1068
          %1076 = vst.msk [vmem:[%s1035] ss:$8 sm:$0x3] %vm1032, %v1073
          %1077 = vst.msk [vmem:[%s1035] ss:$8 sm:$0x0] %vm1032, %v1073
        $region64: #{tpu_custom_call.1} parent=39 // pred_fallthru
          _
        // Predicated region
        $region65: #{tpu_custom_call.1} parent=39 // pred_check
          %p1078 = pneg %p145
        $region66: #{tpu_custom_call.1} parent=39 // pred_check_branch
          %1080 = sbr.rel (%p1078) target = $region68
        $region67: #{tpu_custom_call.1} parent=39 // pred_region
          %1082 = vsyncadd [#allocation4], 0
          %s1084 = sshll.u32 [#allocation10], 4
          %s1085 = int_to_ptr.vmem [resolvable:$true] %s1084
          %s1086 = sshll.u32 %s5, 4
          %s1087 = int_to_ptr.hbm [resolvable:$true] %s1086
          %1089 = dma.vmem_to_hbm [thread:$0]  %s1085, 256, %s1087, [#allocation4]
        $region68: #{tpu_custom_call.1} parent=39 // pred_fallthru
          _
        // Predicated region
        $region69: #{tpu_custom_call.1} parent=39 // pred_check
          %p1090 = pneg %p145
        $region70: #{tpu_custom_call.1} parent=39 // pred_check_branch
          %1092 = sbr.rel (%p1090) target = $region72
        $region71: #{tpu_custom_call.1} parent=39 // pred_region
          %1094 = dma.done [#allocation4], 256
        $region72: #{tpu_custom_call.1} parent=39 // pred_fallthru
          _
      $region40: #{tpu_custom_call.1} parent=5 // pred_fallthru
        _
      %p1095 = scmp.le.s32.totalorder 2, %s17
      // Predicated region
      $region73: #{tpu_custom_call.1} parent=5 // pred_check
        %p1096 = pneg %p1095
      $region74: #{tpu_custom_call.1} parent=5 // pred_check_branch
        %1098 = sbr.rel (%p1096) target = $region76
      $region75: #{tpu_custom_call.1} parent=5 // pred_region
        %s1099 = ssub.s32 %s17, 2
      $region76: #{tpu_custom_call.1} parent=5 // pred_fallthru
        _
    $region6: #{tpu_custom_call.1} parent=1 // loop_footer
      %s21 = sadd.s32 1, %s17
    $region7: #{tpu_custom_call.1} parent=1 // loop_footer_branch
      %16 = sbr.rel target = $region3
    $region8: #{tpu_custom_call.1} parent=1 // loop_exit
      _
    %1100 = vsyncpa [#allocation3], 1
    %s1101 = scalar_lea.sflag [#allocation3], 1
    %1102 = vsyncpa %s1101, 1
    %1103 = vsyncpa [#allocation6], 1
    %1104 = vsyncpa [#allocation9], 1
    %1105 = vsyncpa [#allocation4], 1
    %s1106 = scalar_lea.sflag [#allocation4], 1
    %1107 = vsyncpa %s1106, 1

</llo_original>
